<compile_context>
chip_gen: v7x
topology: tpu7x:2x2x1
jax: 0.10.0
libtpu: 0.0.40
codegen_flags: <defaults>
</compile_context>

<pallas_src>
import functools

import jax
import jax.numpy as jnp
from jax import lax
from jax.experimental import pallas as pl
from jax.experimental.pallas import tpu as pltpu


def _round_up(x, m):
    return (x + m - 1) // m * m


def _attention_kernel(x_ref, w_ref, b_ref, gamma_ref, o_ref, *,
                      m_pad, b_tile, n, eps):
    """One grid step: `b_tile` batch elements, full (C, N) spatial slab.

    x_ref : (b_tile, C, N)  input block (VMEM)
    w_ref : (O, C)          stacked [Wq; Wk; Wv] with zero padding rows
    b_ref : (O, 1)          stacked biases with zero padding rows
    gamma_ref : (1,)        scalar in SMEM
    o_ref : (b_tile, C, N)  output block (VMEM)
    """
    w = w_ref[...]                          # (O, C)
    bias = b_ref[...]                       # (O, 1)
    gamma = gamma_ref[0]                    # scalar read from SMEM
    n_f = float(n)

    def body(b, carry):
        xb = x_ref[b]                                                   # (C, N)

        # Fused Q/K/V projection: one MXU matmul (lhs-last / rhs-first form).
        qkv = jnp.dot(w, xb, preferred_element_type=jnp.float32) + bias

        # Slice at sublane-aligned (multiple-of-8) offsets.  Padded rows are
        # exactly zero (zero weight rows + zero bias), so carrying them through
        # the math below is bit-identical to slicing the unpadded M rows.
        q = qkv[:m_pad]                                                 # (Mp, N)
        k = qkv[m_pad:2 * m_pad]                                        # (Mp, N)
        v = qkv[2 * m_pad:]                                             # (C,  N)

        # L2-normalize over the channel axis per spatial position (EUP rsqrt).
        # Tiny clamp guards an all-zero column (PyTorch would emit inf/nan).
        q_inv = lax.rsqrt(
            jnp.maximum(jnp.sum(q * q, axis=0, keepdims=True), 1e-24))
        k_inv = lax.rsqrt(
            jnp.maximum(jnp.sum(k * k, axis=0, keepdims=True), 1e-24))
        qn = q * q_inv                                                  # (Mp, N)
        kn = k * k_inv                                                  # (Mp, N)

        # tailor = 1 / (N + Q^T (sum_n K + eps)) -- VPU multiply + sublane
        # reduce (no 1-row MXU matmul).  EUP approx reciprocal + one Newton
        # step keeps the result ~f32-exact.
        k_sum = jnp.sum(kn, axis=1, keepdims=True) + eps                # (Mp, 1)
        t = jnp.sum(qn * k_sum, axis=0, keepdims=True)                  # (1, N)
        denom = n_f + t
        r = pl.reciprocal(denom, approx=True)
        tailor = r * (2.0 - denom * r)                                  # (1, N)

        v_sum = jnp.sum(v, axis=1, keepdims=True)                       # (C, 1)

        # matrix^T = V @ Kn^T : contract-last-of-both (MXU A @ B^T form).
        matrix_t = lax.dot_general(v, kn, (((1,), (1,)), ((), ())),
                                   preferred_element_type=jnp.float32)  # (C, Mp)
        # qm = matrix^T @ Qn : standard lhs-last / rhs-first matmul.
        qm = lax.dot_general(matrix_t, qn, (((1,), (0,)), ((), ())),
                             preferred_element_type=jnp.float32)        # (C, N)

        # Fused finalize, written straight to the output block.
        o_ref[b] = ((v_sum + qm) * (gamma * tailor)).astype(o_ref.dtype)
        return carry

    if b_tile == 1:
        body(0, None)
    else:
        # Real loop (not a static Python unroll): bounds the live ranges of the
        # per-batch f32 temporaries so vreg pressure stays flat as b_tile
        # grows; loop overhead is negligible next to the (C, N) matmuls.
        lax.fori_loop(0, b_tile, body, None)


def attention_forward(x, params, *, scale=4, eps=1e-6):
    """x: (B, C, W, H) float32, NCHW like the PyTorch module."""
    B, C, W, H = x.shape
    N = W * H
    M = C // scale
    M_pad = _round_up(max(M, 1), 8)          # sublane-aligned segment offsets
    O = 2 * M_pad + C

    wq, bq, wk, bk, wv, bv, gamma = params

    # Stack [Wq; Wk; Wv] (and biases) so the kernel does ONE fused projection
    # matmul and slices rows at sublane-aligned offsets (padding rows are 0).
    w_stack = jnp.zeros((O, C), jnp.float32)
    w_stack = w_stack.at[:M].set(wq)
    w_stack = w_stack.at[M_pad:M_pad + M].set(wk)
    w_stack = w_stack.at[2 * M_pad:].set(wv)
    b_stack = jnp.zeros((O, 1), jnp.float32)
    b_stack = b_stack.at[:M, 0].set(bq)
    b_stack = b_stack.at[M_pad:M_pad + M, 0].set(bk)
    b_stack = b_stack.at[2 * M_pad:, 0].set(bv)

    # Layout-preserving reshape (no HBM copy).  No spatial padding: blocks use
    # full-extent C and N (legal under the (8,128) rule) so there are no
    # wrapper-side pad / slice HBM round trips.
    x_flat = x.reshape(B, C, N)

    # ---- generation-aware VMEM budgeting -----------------------------------
    try:
        vmem_cap = int(pltpu.get_tpu_info().vmem_capacity_bytes)
    except Exception:                                      # conservative fallback
        vmem_cap = 64 * 1024 * 1024
    two_tensorcores = vmem_cap <= 64 * 1024 * 1024         # v7x-like: 64 MiB, 2 TCs
    vmem_limit = (40 if two_tensorcores else 96) * 1024 * 1024
    vmem_limit = min(vmem_limit, (vmem_cap * 3) // 4)

    f32 = 4
    # Working-set accounting: in/out batch blocks are double-buffered by the
    # BlockSpec pipeline and scale with b_tile; the per-batch intermediates
    # (qkv, qn/kn, qm, finalize temp, matrix^T) are live for one loop
    # iteration only thanks to the fori_loop.
    per_b_block = C * N * f32 * 2 * 2                      # x in + out, double-buffered
    weight_bytes = (O * C + O) * f32 * 2                   # stacked W / b, double-buffered
    inter_bytes = (O + 4 * M_pad + 3 * C + 4) * N * f32 + M_pad * C * f32
    headroom = 2 * 1024 * 1024                             # compiler-internal scratch
    budget = max(vmem_limit - weight_bytes - inter_bytes - headroom, per_b_block)
    b_tile = int(max(1, min(B, budget // per_b_block)))
    if two_tensorcores and B >= 2:
        b_tile = min(b_tile, max(1, B // 2))               # keep grid >= 2 for 2 TCs
    # Keep blocks uniform.  TODO(synk): for prime/awkward B this can fall back
    # to b_tile=1; a cdiv grid with a masked tail block would avoid the cliff.
    while B % b_tile != 0:
        b_tile -= 1
    grid = (B // b_tile,)
    # Make sure the scoped limit actually covers the chosen working set.
    need = weight_bytes + inter_bytes + per_b_block * b_tile + headroom
    vmem_limit = int(min(max(vmem_limit, need), (vmem_cap * 9) // 10))
    # TODO(synk): for very large C*N the single-batch working set itself can
    # exceed VMEM; that needs a two-phase N-tiled reduction grid.
    # TODO(synk): optional bf16 I/O (f32 accumulation) would ~halve HBM traffic
    # for this bandwidth-bound kernel, but changes numerics vs. the f32
    # PyTorch reference, so it is left off here.

    kernel = functools.partial(
        _attention_kernel, m_pad=M_pad, b_tile=b_tile, n=N, eps=eps)

    out_flat = pl.pallas_call(
        kernel,
        out_shape=jax.ShapeDtypeStruct((B, C, N), x.dtype),
        grid_spec=pltpu.PrefetchScalarGridSpec(
            num_scalar_prefetch=0,
            grid=grid,
            in_specs=[
                pl.BlockSpec((b_tile, C, N), lambda i: (i, 0, 0)),      # x
                pl.BlockSpec((O, C), lambda i: (0, 0)),                 # W stack
                pl.BlockSpec((O, 1), lambda i: (0, 0)),                 # b stack
                pl.BlockSpec(memory_space=pltpu.MemorySpace.SMEM),      # gamma
            ],
            out_specs=pl.BlockSpec((b_tile, C, N), lambda i: (i, 0, 0)),
        ),
        compiler_params=pltpu.CompilerParams(
            dimension_semantics=("parallel",),
            vmem_limit_bytes=vmem_limit),
    )(x_flat, w_stack, b_stack, gamma.reshape(1).astype(jnp.float32))

    return out_flat.reshape(B, C, W, H)


def reference_forward(x, params, *, scale=4, eps=1e-6):
    """Pure-JAX reference mirroring the PyTorch forward, for verification."""
    B, C, W, H = x.shape
    N = W * H
    wq, bq, wk, bk, wv, bv, gamma = params
    xf = x.reshape(B, C, N)
    Q = jnp.einsum('mc,bcn->bmn', wq, xf) + bq[None, :, None]
    K = jnp.einsum('mc,bcn->bmn', wk, xf) + bk[None, :, None]
    V = jnp.einsum('oc,bcn->bon', wv, xf) + bv[None, :, None]
    l2 = lambda t: t / jnp.linalg.norm(t, axis=-2, keepdims=True)
    Qn = jnp.transpose(l2(Q), (0, 2, 1))        # (B, N, M)
    Kn = l2(K)                                   # (B, M, N)
    tailor = 1.0 / (N + jnp.einsum('bnm,bm->bn', Qn, jnp.sum(Kn, axis=-1) + eps))
    v_sum = jnp.sum(V, axis=-1)[:, :, None]      # (B, C, 1)
    matrix = jnp.einsum('bmn,bcn->bmc', Kn, V)   # (B, M, C)
    matrix_sum = v_sum + jnp.einsum('bnm,bmc->bcn', Qn, matrix)
    weight_value = matrix_sum * tailor[:, None, :]
    return (gamma[0] * weight_value).reshape(B, C, W, H)


def init_params(key, C, scale=4):
    M = C // scale
    k = jax.random.split(key, 7)
    wq = jax.random.normal(k[0], (M, C), jnp.float32) * 0.1
    bq = jax.random.normal(k[1], (M,), jnp.float32) * 0.1
    wk = jax.random.normal(k[2], (M, C), jnp.float32) * 0.1
    bk = jax.random.normal(k[3], (M,), jnp.float32) * 0.1
    wv = jax.random.normal(k[4], (C, C), jnp.float32) * 0.1
    bv = jax.random.normal(k[5], (C,), jnp.float32) * 0.1
    # nn.Parameter(torch.zeros(1)) in __init__; use a nonzero deterministic
    # value so the test exercises the full compute path.
    gamma = jnp.array([0.5], jnp.float32)
    return (wq, bq, wk, bk, wv, bv, gamma)


if __name__ == "__main__":
    B, C, W, H = 4, 16, 16, 16          # N=256, M=4 -> M_pad=8, O=32
    scale = 4
    key = jax.random.PRNGKey(0)
    kx, kp = jax.random.split(key)
    x = jax.random.normal(kx, (B, C, W, H), jnp.float32)
    params = init_params(kp, C, scale=scale)

    out = attention_forward(x, params, scale=scale)
    out = jax.block_until_ready(out)

    ref = reference_forward(x, params, scale=scale)
    assert out.shape == (B, C, W, H)
    err = float(jnp.max(jnp.abs(out - ref)))
    assert jnp.allclose(out, ref, atol=1e-4, rtol=1e-3), f"max abs err {err}"
    print("KERNEL_OK")
</pallas_src>

<mosaic_0001>
module attributes {stable_mosaic.version = 11 : i64} {
  func.func @_attention_kernel(%arg0: i32, %arg1: memref<2x16x256xf32, #tpu.memory_space<vmem>>, %arg2: memref<32x16xf32, #tpu.memory_space<vmem>>, %arg3: memref<32x1xf32, #tpu.memory_space<vmem>>, %arg4: memref<1xf32, #tpu.memory_space<smem>>, %arg5: memref<2x16x256xf32, #tpu.memory_space<vmem>>) attributes {dimension_semantics = [#tpu.dimension_semantics<parallel>], iteration_bounds = array<i64: 2>, scalar_prefetch = 0 : i64, scratch_operands = 0 : i64, tpu.core_type = #tpu.core_type<tc>, window_params = [{transform_indices = @transform_0, window_bounds = array<i64: 2, 16, 256>}, {pipeline_mode = #tpu.pipeline_mode<synchronous>, transform_indices = @transform_1, window_bounds = array<i64: 32, 16>}, {pipeline_mode = #tpu.pipeline_mode<synchronous>, transform_indices = @transform_2, window_bounds = array<i64: 32, 1>}, {transform_indices = @transform_3, window_bounds = array<i64: 1>}, {transform_indices = @transform_4, window_bounds = array<i64: 2, 16, 256>}]} {
    %c0 = arith.constant 0 : index
    %c0_0 = arith.constant 0 : index
    %0 = vector.load %arg2[%c0, %c0_0] : memref<32x16xf32, #tpu.memory_space<vmem>>, vector<32x16xf32>
    %c0_1 = arith.constant 0 : index
    %c0_2 = arith.constant 0 : index
    %1 = vector.load %arg3[%c0_1, %c0_2] : memref<32x1xf32, #tpu.memory_space<vmem>>, vector<32x1xf32>
    %c0_3 = arith.constant 0 : index
    %2 = memref.load %arg4[%c0_3] : memref<1xf32, #tpu.memory_space<smem>>
    %c0_i32 = arith.constant 0 : i32
    %c2_i32 = arith.constant 2 : i32
    %3 = arith.addi %c0_i32, %c2_i32 : i32
    %c1_i32 = arith.constant 1 : i32
    scf.for %arg6 = %c0_i32 to %3 step %c1_i32  : i32 {
      %4 = arith.index_cast %arg6 : i32 to index
      %c0_5 = arith.constant 0 : index
      %c0_6 = arith.constant 0 : index
      %5 = vector.load %arg1[%4, %c0_5, %c0_6] : memref<2x16x256xf32, #tpu.memory_space<vmem>>, vector<1x16x256xf32>
      %6 = vector.shape_cast %5 : vector<1x16x256xf32> to vector<16x256xf32>
      %cst = arith.constant dense<0.000000e+00> : vector<32x256xf32>
      %7 = tpu.matmul %0, %6, %cst {dimension_numbers = #tpu.dot_dimension_numbers<[1], [0], [0], [1], [0, 0, 1, 1], [], []>} : vector<32x16xf32>, vector<16x256xf32>, vector<32x256xf32> -> vector<32x256xf32>
      %8 = vector.broadcast %1 : vector<32x1xf32> to vector<32x256xf32>
      %9 = arith.addf %7, %8 : vector<32x256xf32>
      %10 = vector.extract_strided_slice %9 {offsets = [0, 0], sizes = [8, 256], strides = [1, 1]} : vector<32x256xf32> to vector<8x256xf32>
      %11 = vector.extract_strided_slice %9 {offsets = [8, 0], sizes = [8, 256], strides = [1, 1]} : vector<32x256xf32> to vector<8x256xf32>
      %12 = vector.extract_strided_slice %9 {offsets = [16, 0], sizes = [16, 256], strides = [1, 1]} : vector<32x256xf32> to vector<16x256xf32>
      %13 = arith.mulf %10, %10 : vector<8x256xf32>
      %cst_7 = arith.constant dense<0.000000e+00> : vector<256xf32>
      %14 = vector.multi_reduction <add>, %13, %cst_7 [0] : vector<8x256xf32> to vector<256xf32>
      %15 = vector.shape_cast %14 : vector<256xf32> to vector<1x256xf32>
      %cst_8 = arith.constant 1.000000e-24 : f32
      %16 = vector.broadcast %cst_8 : f32 to vector<1x256xf32>
      %17 = arith.maximumf %15, %16 : vector<1x256xf32>
      %18 = math.rsqrt %17 : vector<1x256xf32>
      %19 = arith.mulf %11, %11 : vector<8x256xf32>
      %cst_9 = arith.constant dense<0.000000e+00> : vector<256xf32>
      %20 = vector.multi_reduction <add>, %19, %cst_9 [0] : vector<8x256xf32> to vector<256xf32>
      %21 = vector.shape_cast %20 : vector<256xf32> to vector<1x256xf32>
      %cst_10 = arith.constant 1.000000e-24 : f32
      %22 = vector.broadcast %cst_10 : f32 to vector<1x256xf32>
      %23 = arith.maximumf %21, %22 : vector<1x256xf32>
      %24 = math.rsqrt %23 : vector<1x256xf32>
      %25 = vector.broadcast %18 : vector<1x256xf32> to vector<8x256xf32>
      %26 = arith.mulf %10, %25 : vector<8x256xf32>
      %27 = vector.broadcast %24 : vector<1x256xf32> to vector<8x256xf32>
      %28 = arith.mulf %11, %27 : vector<8x256xf32>
      %cst_11 = arith.constant dense<0.000000e+00> : vector<8xf32>
      %29 = vector.multi_reduction <add>, %28, %cst_11 [1] : vector<8x256xf32> to vector<8xf32>
      %30 = vector.shape_cast %29 : vector<8xf32> to vector<8x1xf32>
      %cst_12 = arith.constant 9.99999997E-7 : f32
      %31 = vector.broadcast %cst_12 : f32 to vector<8x1xf32>
      %32 = arith.addf %30, %31 : vector<8x1xf32>
      %33 = vector.broadcast %32 : vector<8x1xf32> to vector<8x256xf32>
      %34 = arith.mulf %26, %33 : vector<8x256xf32>
      %cst_13 = arith.constant dense<0.000000e+00> : vector<256xf32>
      %35 = vector.multi_reduction <add>, %34, %cst_13 [0] : vector<8x256xf32> to vector<256xf32>
      %36 = vector.shape_cast %35 : vector<256xf32> to vector<1x256xf32>
      %cst_14 = arith.constant 2.560000e+02 : f32
      %37 = vector.broadcast %cst_14 : f32 to vector<1x256xf32>
      %38 = arith.addf %37, %36 : vector<1x256xf32>
      %39 = tpu.reciprocal %38 {approx = true} : vector<1x256xf32> -> vector<1x256xf32>
      %40 = arith.mulf %38, %39 : vector<1x256xf32>
      %cst_15 = arith.constant 2.000000e+00 : f32
      %41 = vector.broadcast %cst_15 : f32 to vector<1x256xf32>
      %42 = arith.subf %41, %40 : vector<1x256xf32>
      %43 = arith.mulf %39, %42 : vector<1x256xf32>
      %cst_16 = arith.constant dense<0.000000e+00> : vector<16xf32>
      %44 = vector.multi_reduction <add>, %12, %cst_16 [1] : vector<16x256xf32> to vector<16xf32>
      %45 = vector.shape_cast %44 : vector<16xf32> to vector<16x1xf32>
      %cst_17 = arith.constant dense<0.000000e+00> : vector<16x8xf32>
      %46 = tpu.matmul %12, %28, %cst_17 {dimension_numbers = #tpu.dot_dimension_numbers<[1], [1], [0], [0], [0, 0, 1, 0], [], []>} : vector<16x256xf32>, vector<8x256xf32>, vector<16x8xf32> -> vector<16x8xf32>
      %cst_18 = arith.constant dense<0.000000e+00> : vector<16x256xf32>
      %47 = tpu.matmul %46, %26, %cst_18 {dimension_numbers = #tpu.dot_dimension_numbers<[1], [0], [0], [1], [0, 0, 1, 1], [], []>} : vector<16x8xf32>, vector<8x256xf32>, vector<16x256xf32> -> vector<16x256xf32>
      %48 = vector.broadcast %45 : vector<16x1xf32> to vector<16x256xf32>
      %49 = arith.addf %48, %47 : vector<16x256xf32>
      %50 = vector.broadcast %2 : f32 to vector<1x256xf32>
      %51 = arith.mulf %50, %43 : vector<1x256xf32>
      %52 = vector.broadcast %51 : vector<1x256xf32> to vector<16x256xf32>
      %53 = arith.mulf %49, %52 : vector<16x256xf32>
      %54 = arith.index_cast %arg6 : i32 to index
      %c0_19 = arith.constant 0 : index
      %c0_20 = arith.constant 0 : index
      %55 = vector.load %arg5[%54, %c0_19, %c0_20] : memref<2x16x256xf32, #tpu.memory_space<vmem>>, vector<1x16x256xf32>
      %56 = vector.shape_cast %55 : vector<1x16x256xf32> to vector<16x256xf32>
      %57 = vector.shape_cast %53 : vector<16x256xf32> to vector<1x16x256xf32>
      tpu.vector_store %arg5[%54, %c0_19, %c0_20], %57 {strides = array<i32>} : memref<2x16x256xf32, #tpu.memory_space<vmem>>, vector<1x16x256xf32>,
    }
    %c2_i32_4 = arith.constant 2 : i32
    return
  }
  func.func @transform_0(%arg0: i32) -> (i32, i32, i32) {
    %c0_i32 = arith.constant 0 : i32
    %c0_i32_0 = arith.constant 0 : i32
    %c0_i32_1 = arith.constant 0 : i32
    return %arg0, %c0_i32, %c0_i32_0 : i32, i32, i32
  }
  func.func @transform_1(%arg0: i32) -> (i32, i32) {
    %c0_i32 = arith.constant 0 : i32
    %c0_i32_0 = arith.constant 0 : i32
    %c0_i32_1 = arith.constant 0 : i32
    return %c0_i32, %c0_i32_0 : i32, i32
  }
  func.func @transform_2(%arg0: i32) -> (i32, i32) {
    %c0_i32 = arith.constant 0 : i32
    %c0_i32_0 = arith.constant 0 : i32
    %c0_i32_1 = arith.constant 0 : i32
    return %c0_i32, %c0_i32_0 : i32, i32
  }
  func.func @transform_3(%arg0: i32) -> i32 {
    %c0_i32 = arith.constant 0 : i32
    %c0_i32_0 = arith.constant 0 : i32
    return %c0_i32 : i32
  }
  func.func @transform_4(%arg0: i32) -> (i32, i32, i32) {
    %c0_i32 = arith.constant 0 : i32
    %c0_i32_0 = arith.constant 0 : i32
    %c0_i32_1 = arith.constant 0 : i32
    return %arg0, %c0_i32, %c0_i32_0 : i32, i32, i32
  }
}

</mosaic_0001>

<llo_original>
// kernel: tpu_custom_call.1
$region0: #{tpu_custom_call.1}
  #allocation0 [shape = 'u32[]', space=smem, size = 0x4, offset = 0x4, fixed_abs, tag = 'smem constant byte address 0x4 - core index']
  #allocation1 [shape = 'u32[144,128]{1,0:T(1,128)}', space=vmem, size = 0x12000, scoped, tag = 'internal scratch']
  #allocation2 [shape = 'f32[1]{0:T(128)S(6)}', space=smem, size = 0x200, scoped, tag = 'scoped memory for tpu_custom_call.1']
  %s0 = inlined_call_operand.hbm [shape: f32[4,16,256], index: 0, kind: input, shape index: {}]
  %s1 = inlined_call_operand.vmem [shape: f32[32,16], index: 1, kind: input, shape index: {}]
  %s2 = inlined_call_operand.vmem [shape: f32[32,1], index: 2, kind: input, shape index: {}]
  %s3 = inlined_call_operand.<no memory space> [shape: f32[1], index: 3, kind: input, shape index: {}]
  %s4 = inlined_call_operand.hbm [shape: f32[4,16,256], index: 4, kind: output, shape index: {}]
  %s5 = sld [smem:[#allocation0]]
  $region60: #{tpu_custom_call.1} parent=0
    _
  %s7 = ssub.s32 1, %s5
  %s8 = scalar_select 0, %s7, %s5
  %9 = sst [smem:[#allocation2]] %s3
  $region1: #{tpu_custom_call.1} parent=0
    #allocation3 [shape = 'u8[65536]{0}', space=vmem, size = 0x10000, scoped, tag = 'input window, operand 0']
    #allocation4 [shape = 's32[2]{0}', space=sflag, size = 0x8, scoped, tag = 'scoped memory for tpu_custom_call.1']
    #allocation5 [shape = 's32[2]{0}', space=sflag, size = 0x8, scoped, tag = 'scoped memory for tpu_custom_call.1']
    #allocation6 [shape = 'u8[65536]{0}', space=vmem, size = 0x10000, scoped, tag = 'output window, operand 0']
    %10 = vsyncpa [#allocation4], 0
    %s11 = scalar_lea.sflag [#allocation4], 1
    %12 = vsyncpa %s11, 0
    %13 = vsyncpa [#allocation5], 0
    %s14 = scalar_lea.sflag [#allocation5], 1
    %15 = vsyncpa %s14, 0
    loop: start=0, step=1, limit=4
    $region2: #{tpu_custom_call.1} parent=1 // loop_pre_header
      _
    $region3: #{tpu_custom_call.1} parent=1 // loop_header
      %s17 = sphi 0, %s21
      %p18 = scmp.ge.s32.totalorder %s17, 4
      %s27 = sphi 0, %s29
      %s30 = sphi 0, %s27
      %s31 = sphi 0, %s30
      %s47 = sphi 0, %s31
      %s51 = sphi 0, %s51
      %s53 = sphi 0, %s51
      %s54 = sphi 0, %s53
      %s68 = sphi 0, %s54
      %s72 = sphi 0, %s72
      %s74 = sphi 0, %s72
      %s75 = sphi 0, %s74
      %s89 = sphi 0, %s75
      %s93 = sphi 0, %s93
      %s95 = sphi 0, %s93
      %s96 = sphi 0, %s95
      %s110 = sphi 0, %s96
      %s116 = sphi 0, %s118
      %s119 = sphi 0, %s116
      %s120 = sphi 0, %s119
      %s136 = sphi 0, %s120
    $region4: #{tpu_custom_call.1} parent=1 // loop_header_branch
      %20 = sbr.rel (%p18) target = $region8
    $region5: #{tpu_custom_call.1} parent=1 // loop_body
      %s22 = ssub.s32 %s17, 1
      %s23 = ssub.s32 %s17, 2
      %s24 = sadd.s32 %s17, 1
      %s25 = ssub.s32 %s17, %s24
      %p26 = scmp.eq.s32.totalorder %s25, 0
      %s28 = sadd.s32 %s27, 1
      %s29 = scalar_select %p26, %s27, %s28
      %p32 = pneg %p26
      %p33 = scmp.eq.s32.totalorder %s17, 1
      %p34 = por %p32, %p33
      %p35 = scmp.ne.s32.totalorder %s27, %s30
      %p36 = scmp.eq.s32.totalorder %s17, 0
      %p37 = por %p35, %p36
      %p38 = scmp.ne.s32.totalorder %s27, %s30
      %p39 = scmp.eq.s32.totalorder %s22, 1
      %p40 = por %p38, %p39
      %p41 = scmp.ne.s32.totalorder %s30, %s31
      %p42 = scmp.eq.s32.totalorder %s22, 0
      %p43 = por %p41, %p42
      %p44 = scmp.ne.s32.totalorder %s30, %s31
      %p45 = scmp.eq.s32.totalorder %s23, 1
      %p46 = por %p44, %p45
      %p48 = scmp.ne.s32.totalorder %s31, %s47
      %p49 = scmp.eq.s32.totalorder %s23, 0
      %p50 = por %p48, %p49
      %s52 = sadd.s32 %s51, 1
      %p55 = scmp.eq.s32.totalorder %s17, 1
      %p56 = scmp.ne.s32.totalorder %s51, %s53
      %p57 = scmp.eq.s32.totalorder %s17, 0
      %p58 = por %p56, %p57
      %p59 = scmp.ne.s32.totalorder %s51, %s53
      %p60 = scmp.eq.s32.totalorder %s22, 1
      %p61 = por %p59, %p60
      %p62 = scmp.ne.s32.totalorder %s53, %s54
      %p63 = scmp.eq.s32.totalorder %s22, 0
      %p64 = por %p62, %p63
      %p65 = scmp.ne.s32.totalorder %s53, %s54
      %p66 = scmp.eq.s32.totalorder %s23, 1
      %p67 = por %p65, %p66
      %p69 = scmp.ne.s32.totalorder %s54, %s68
      %p70 = scmp.eq.s32.totalorder %s23, 0
      %p71 = por %p69, %p70
      %s73 = sadd.s32 %s72, 1
      %p76 = scmp.eq.s32.totalorder %s17, 1
      %p77 = scmp.ne.s32.totalorder %s72, %s74
      %p78 = scmp.eq.s32.totalorder %s17, 0
      %p79 = por %p77, %p78
      %p80 = scmp.ne.s32.totalorder %s72, %s74
      %p81 = scmp.eq.s32.totalorder %s22, 1
      %p82 = por %p80, %p81
      %p83 = scmp.ne.s32.totalorder %s74, %s75
      %p84 = scmp.eq.s32.totalorder %s22, 0
      %p85 = por %p83, %p84
      %p86 = scmp.ne.s32.totalorder %s74, %s75
      %p87 = scmp.eq.s32.totalorder %s23, 1
      %p88 = por %p86, %p87
      %p90 = scmp.ne.s32.totalorder %s75, %s89
      %p91 = scmp.eq.s32.totalorder %s23, 0
      %p92 = por %p90, %p91
      %s94 = sadd.s32 %s93, 1
      %p97 = scmp.eq.s32.totalorder %s17, 1
      %p98 = scmp.ne.s32.totalorder %s93, %s95
      %p99 = scmp.eq.s32.totalorder %s17, 0
      %p100 = por %p98, %p99
      %p101 = scmp.ne.s32.totalorder %s93, %s95
      %p102 = scmp.eq.s32.totalorder %s22, 1
      %p103 = por %p101, %p102
      %p104 = scmp.ne.s32.totalorder %s95, %s96
      %p105 = scmp.eq.s32.totalorder %s22, 0
      %p106 = por %p104, %p105
      %p107 = scmp.ne.s32.totalorder %s95, %s96
      %p108 = scmp.eq.s32.totalorder %s23, 1
      %p109 = por %p107, %p108
      %p111 = scmp.ne.s32.totalorder %s96, %s110
      %p112 = scmp.eq.s32.totalorder %s23, 0
      %p113 = por %p111, %p112
      %s114 = ssub.s32 %s17, %s24
      %p115 = scmp.eq.s32.totalorder %s114, 0
      %s117 = sadd.s32 %s116, 1
      %s118 = scalar_select %p115, %s116, %s117
      %p121 = pneg %p115
      %p122 = scmp.eq.s32.totalorder %s17, 1
      %p123 = por %p121, %p122
      %p124 = scmp.ne.s32.totalorder %s116, %s119
      %p125 = scmp.eq.s32.totalorder %s17, 0
      %p126 = por %p124, %p125
      %p127 = scmp.ne.s32.totalorder %s116, %s119
      %p128 = scmp.eq.s32.totalorder %s22, 1
      %p129 = por %p127, %p128
      %p130 = scmp.ne.s32.totalorder %s119, %s120
      %p131 = scmp.eq.s32.totalorder %s22, 0
      %p132 = por %p130, %p131
      %p133 = scmp.ne.s32.totalorder %s119, %s120
      %p134 = scmp.eq.s32.totalorder %s23, 1
      %p135 = por %p133, %p134
      %p137 = scmp.ne.s32.totalorder %s120, %s136
      %p138 = scmp.eq.s32.totalorder %s23, 0
      %p139 = por %p137, %p138
      %p140 = scmp.le.s32.totalorder 1, %s17
      %p141 = scmp.lt.s32.totalorder %s17, 3
      %p142 = pnand %p140, %p141
      %p143 = pneg %p142
      // Predicated region
      $region9: #{tpu_custom_call.1} parent=5 // pred_check
        _
      $region10: #{tpu_custom_call.1} parent=5 // pred_check_branch
        %145 = sbr.rel (%p142) target = $region12
      $region11: #{tpu_custom_call.1} parent=5 // pred_region
        %s146 = ssub.s32 %s17, 1
        // Predicated region
        $region13: #{tpu_custom_call.1} parent=11 // pred_check
          %p147 = pneg %p64
        $region14: #{tpu_custom_call.1} parent=11 // pred_check_branch
          %149 = sbr.rel (%p147) target = $region16
        $region15: #{tpu_custom_call.1} parent=11 // pred_region
          _
        $region16: #{tpu_custom_call.1} parent=11 // pred_fallthru
          _
        // Predicated region
        $region17: #{tpu_custom_call.1} parent=11 // pred_check
          %p150 = pneg %p85
        $region18: #{tpu_custom_call.1} parent=11 // pred_check_branch
          %152 = sbr.rel (%p150) target = $region20
        $region19: #{tpu_custom_call.1} parent=11 // pred_region
          _
        $region20: #{tpu_custom_call.1} parent=11 // pred_fallthru
          _
        // Predicated region
        $region21: #{tpu_custom_call.1} parent=11 // pred_check
          %p153 = pneg %p106
        $region22: #{tpu_custom_call.1} parent=11 // pred_check_branch
          %155 = sbr.rel (%p153) target = $region24
        $region23: #{tpu_custom_call.1} parent=11 // pred_region
          _
        $region24: #{tpu_custom_call.1} parent=11 // pred_fallthru
          _
      $region12: #{tpu_custom_call.1} parent=5 // pred_fallthru
        _
      %p156 = scmp.lt.s32.totalorder %s17, 2
      // Predicated region
      $region25: #{tpu_custom_call.1} parent=5 // pred_check
        %p157 = pneg %p156
      $region26: #{tpu_custom_call.1} parent=5 // pred_check_branch
        %159 = sbr.rel (%p157) target = $region28
      $region27: #{tpu_custom_call.1} parent=5 // pred_region
        // Predicated region
        $region29: #{tpu_custom_call.1} parent=27 // pred_check
          %p160 = pneg %p37
        $region30: #{tpu_custom_call.1} parent=27 // pred_check_branch
          %162 = sbr.rel (%p160) target = $region32
        $region31: #{tpu_custom_call.1} parent=27 // pred_region
          %s163 = sand.u32 %s27, 1
          %s164 = scalar_lea.sflag [#allocation4], %s163
          %s165 = sand.u32 %s27, 1
          %s166 = smul.addr %s165, 64
          %s167 = scalar_lea.vmem [#allocation3], %s166
          %s168 = smul.u32 2, %s17
          %s170 = ssub.s32 1024, 1024
          %171 = vsyncadd %s164, %s170
          %s172 = smul.addr %s168, 4
          %s173 = smul.addr %s172, 128
          %s174 = scalar_lea.hbm %s0, %s173
          %s175 = sshll.u32 %s167, 4
          %s176 = int_to_ptr.vmem [resolvable:$true] %s175
          %181 = dma.hbm_to_vmem [thread:$0]  %s174, 1024, %s176, %s164, 256, 256, 16
        $region32: #{tpu_custom_call.1} parent=27 // pred_fallthru
          _
      $region28: #{tpu_custom_call.1} parent=5 // pred_fallthru
        _
      %p182 = scmp.le.s32.totalorder 1, %s17
      %p183 = scmp.lt.s32.totalorder %s17, 3
      %p184 = pnand %p182, %p183
      %p185 = pneg %p184
      // Predicated region
      $region33: #{tpu_custom_call.1} parent=5 // pred_check
        _
      $region34: #{tpu_custom_call.1} parent=5 // pred_check_branch
        %187 = sbr.rel (%p184) target = $region36
      $region35: #{tpu_custom_call.1} parent=5 // pred_region
        %s188 = ssub.s32 %s17, 1
        %s189 = sand.u32 %s30, 1
        %s190 = scalar_lea.sflag [#allocation4], %s189
        %s191 = sand.u32 %s30, 1
        %s192 = smul.addr %s191, 64
        %s193 = scalar_lea.vmem [#allocation3], %s192
        // Predicated region
        $region37: #{tpu_custom_call.1} parent=35 // pred_check
          %p194 = pneg %p43
        $region38: #{tpu_custom_call.1} parent=35 // pred_check_branch
          %196 = sbr.rel (%p194) target = $region40
        $region39: #{tpu_custom_call.1} parent=35 // pred_region
          %197 = dma.done %s190, 1024
        $region40: #{tpu_custom_call.1} parent=35 // pred_fallthru
          _
        %s198 = sand.u32 %s30, 1
        %s199 = scalar_lea.sflag [#allocation4], %s198
        %s200 = sand.u32 %s30, 1
        %s201 = smul.addr %s200, 64
        %s202 = scalar_lea.vmem [#allocation3], %s201
        %p203 = pneg %p43
        %p204 = pneg %p40
        %p205 = pneg %p64
        %p206 = pneg %p61
        %p207 = pneg %p85
        %p208 = pneg %p82
        %p209 = pneg %p106
        %p210 = pneg %p103
        %p211 = pneg %p132
        %p212 = pneg %p129
        %s213 = sand.u32 %s119, 1
        %s214 = scalar_lea.sflag [#allocation5], %s213
        %s215 = sand.u32 %s119, 1
        %s216 = smul.addr %s215, 64
        %s217 = scalar_lea.vmem [#allocation6], %s216
        %s218 = smul.u32 2, %s22
        %s219 = smul.u32 2, %s22
        %v220 = vld [vmem:[%s1] sm:$0xff]
        %v221 = vld [vmem:[%s1 + $0x8] sm:$0xff]
        %v222 = vld [vmem:[%s1 + $0x10] sm:$0xff]
        %v223 = vld [vmem:[%s1 + $0x18] sm:$0xff]
        %v224 = vld [vmem:[%s2] sm:$0xff]
        %v225 = vld [vmem:[%s2 + $0x8] sm:$0xff]
        %v226 = vld [vmem:[%s2 + $0x10] sm:$0xff]
        %v227 = vld [vmem:[%s2 + $0x18] sm:$0xff]
        %s228 = sld [smem:[#allocation2]]
        loop: start=0, step=1, limit=2
        $region41: #{tpu_custom_call.1} parent=35 // loop_pre_header
          _
        $region42: #{tpu_custom_call.1} parent=35 // loop_header
          %s230 = sphi 0, %s234
          %p231 = scmp.ge.s32.totalorder %s230, 2
        $region43: #{tpu_custom_call.1} parent=35 // loop_header_branch
          %233 = sbr.rel (%p231) target = $region47
        $region44: #{tpu_custom_call.1} parent=35 // loop_body
          %s235 = smul.u32 %s230, 4
          %s236 = smul.addr %s235, 8
          %s237 = scalar_lea.vmem %s193, %s236 [#allocation3]
          %v238 = vld [vmem:[%s237] sm:$0xff]
          %v239 = vld [vmem:[%s237 + $0x8] sm:$0xff]
          %v240 = vld [vmem:[%s237 + $0x10] sm:$0xff]
          %v241 = vld [vmem:[%s237 + $0x18] sm:$0xff]
          %243 = vset.pattern.permute.xlu0 0
          %244 = vperm.xlu0 %243, %v224
          %v245 = vpop.permute.xlu0 %244
          %248 = vset.pattern.permute.xlu0 0
          %249 = vperm.xlu0 %248, %v225
          %v250 = vpop.permute.xlu0 %249
          %253 = vset.pattern.permute.xlu0 0
          %254 = vperm.xlu0 %253, %v226
          %v255 = vpop.permute.xlu0 %254
          %258 = vset.pattern.permute.xlu0 0
          %259 = vperm.xlu0 %258, %v227
          %v260 = vpop.permute.xlu0 %259
          %vm262 = vcmask 130048
          %v264 = vsel %vm262, %v220, 0
          %v267 = vsel %vm262, %v221, 0
          %v270 = vsel %vm262, %v222, 0
          %v273 = vsel %vm262, %v223, 0
          %275 = vmatprep.subr.mxu0 %v239
          %276 = vmatpush1.msra.mxu0 %v238
          %277 = vmatprep.subr.mxu0 %v241
          %278 = vmatpush1.msra.mxu0 %v240
          %279 = vmatprep.subr.mxu0 0.0
          %280 = vmatpush1.msra.mxu0 0.0
          %281 = vmatprep.subr.mxu0 0.0
          %282 = vmatpush1.msra.mxu0 0.0
          %283 = vmatprep.subr.mxu0 0.0
          %284 = vmatpush1.msra.mxu0 0.0
          %285 = vmatprep.subr.mxu0 0.0
          %286 = vmatpush1.msra.mxu0 0.0
          %287 = vmatprep.subr.mxu0 0.0
          %288 = vmatpush1.msra.mxu0 0.0
          %289 = vmatprep.subr.mxu0 0.0
          %290 = vmatpush1.msra.mxu0 0.0
          %291 = vmatprep.subr.mxu0 0.0
          %292 = vmatpush1.msra.mxu0 0.0
          %293 = vmatprep.subr.mxu0 0.0
          %294 = vmatpush1.msra.mxu0 0.0
          %295 = vmatprep.subr.mxu0 0.0
          %296 = vmatpush1.msra.mxu0 0.0
          %297 = vmatprep.subr.mxu0 0.0
          %298 = vmatpush1.msra.mxu0 0.0
          %299 = vmatprep.subr.mxu0 0.0
          %300 = vmatpush1.msra.mxu0 0.0
          %301 = vmatprep.subr.mxu0 0.0
          %302 = vmatpush1.msra.mxu0 0.0
          %303 = vmatprep.subr.mxu0 0.0
          %304 = vmatpush1.msra.mxu0 0.0
          %305 = vmatprep.subr.mxu0 0.0
          %306 = vmatpush1.msra.mxu0 0.0
          %307 = vmatprep.subr.mxu0 0.0
          %308 = vmatpush1.msra.mxu0 0.0
          %309 = vmatprep.subr.mxu0 0.0
          %310 = vmatpush1.msra.mxu0 0.0
          %311 = vmatprep.subr.mxu0 0.0
          %312 = vmatpush1.msra.mxu0 0.0
          %313 = vmatprep.subr.mxu0 0.0
          %314 = vmatpush1.msra.mxu0 0.0
          %315 = vmatprep.subr.mxu0 0.0
          %316 = vmatpush1.msra.mxu0 0.0
          %317 = vmatprep.subr.mxu0 0.0
          %318 = vmatpush1.msra.mxu0 0.0
          %319 = vmatprep.subr.mxu0 0.0
          %320 = vmatpush1.msra.mxu0 0.0
          %321 = vmatprep.subr.mxu0 0.0
          %322 = vmatpush1.msra.mxu0 0.0
          %323 = vmatprep.subr.mxu0 0.0
          %324 = vmatpush1.msra.mxu0 0.0
          %325 = vmatprep.subr.mxu0 0.0
          %326 = vmatpush1.msra.mxu0 0.0
          %327 = vmatprep.subr.mxu0 0.0
          %328 = vmatpush1.msra.mxu0 0.0
          %329 = vmatprep.subr.mxu0 0.0
          %330 = vmatpush1.msra.mxu0 0.0
          %331 = vmatprep.subr.mxu0 0.0
          %332 = vmatpush1.msra.mxu0 0.0
          %333 = vmatprep.subr.mxu0 0.0
          %334 = vmatpush1.msra.mxu0 0.0
          %335 = vmatprep.subr.mxu0 0.0
          %336 = vmatpush1.msra.mxu0 0.0
          %337 = vmatprep.subr.mxu0 0.0
          %338 = vmatpush1.msra.mxu0 0.0
          %339 = vmatprep.mubr.f32.mxu0 0.0
          %340 = vmatmul.mubr.f32.gmra.mrb[0].mxu0 %v264
          %v341 = vpop.f32.mrb[0].mxu0
          %v342 = vadd.f32 %v245, %v341
          %v343 = vpop.f32.mrb[0].mxu0
          %v344 = vadd.f32 %v245, %v343
          %345 = vmatprep.mubr.f32.mxu0 0.0
          %346 = vmatmul.mubr.f32.gmra.mrb[0].mxu0 %v267
          %v347 = vpop.f32.mrb[0].mxu0
          %v348 = vadd.f32 %v250, %v347
          %v349 = vpop.f32.mrb[0].mxu0
          %v350 = vadd.f32 %v250, %v349
          %351 = vmatprep.mubr.f32.mxu0 0.0
          %352 = vmatmul.mubr.f32.gmra.mrb[0].mxu0 %v270
          %v353 = vpop.f32.mrb[0].mxu0
          %v354 = vadd.f32 %v255, %v353
          %v355 = vpop.f32.mrb[0].mxu0
          %v356 = vadd.f32 %v255, %v355
          %357 = vmatprep.mubr.f32.mxu0 0.0
          %358 = vmatmul.mubr.f32.gmra.mrb[0].mxu0 %v273
          %v359 = vpop.f32.mrb[0].mxu0
          %v360 = vadd.f32 %v260, %v359
          %v361 = vpop.f32.mrb[0].mxu0
          %v362 = vadd.f32 %v260, %v361
          %363 = vdwg.mxu0
          %v364 = vmul.f32 %v342, %v342
          %v365 = vmul.f32 %v344, %v344
          %v366 = vrot.slane %v364, 4
          %v367 = vadd.f32 %v364, %v366
          %v368 = vrot.slane %v367, 2
          %v369 = vadd.f32 %v367, %v368
          %v370 = vrot.slane %v369, 1
          %v371 = vadd.f32 %v369, %v370
          %v372 = vrot.slane %v365, 4
          %v373 = vadd.f32 %v365, %v372
          %v374 = vrot.slane %v373, 2
          %v375 = vadd.f32 %v373, %v374
          %v376 = vrot.slane %v375, 1
          %v377 = vadd.f32 %v375, %v376
          %v378 = vmax.f32 %v371, 1e-24
          %v379 = vmax.f32 %v377, 1e-24
          %v380 = vrsqrt.pop %v378
          %v381 = vrsqrt.pop %v379
          %v382 = vmul.f32 %v348, %v348
          %v383 = vmul.f32 %v350, %v350
          %v384 = vrot.slane %v382, 4
          %v385 = vadd.f32 %v382, %v384
          %v386 = vrot.slane %v385, 2
          %v387 = vadd.f32 %v385, %v386
          %v388 = vrot.slane %v387, 1
          %v389 = vadd.f32 %v387, %v388
          %v390 = vrot.slane %v383, 4
          %v391 = vadd.f32 %v383, %v390
          %v392 = vrot.slane %v391, 2
          %v393 = vadd.f32 %v391, %v392
          %v394 = vrot.slane %v393, 1
          %v395 = vadd.f32 %v393, %v394
          %v396 = vmax.f32 %v389, 1e-24
          %v397 = vmax.f32 %v395, 1e-24
          %v398 = vrsqrt.pop %v396
          %v399 = vrsqrt.pop %v397
          %v400 = vmul.f32 %v342, %v380
          %v401 = vmul.f32 %v344, %v381
          %v402 = vmul.f32 %v348, %v398
          %v403 = vmul.f32 %v350, %v399
          %v404 = vadd.f32 %v402, %v403
          %405 = vadd.xlane.f32.xlu0 %v404
          %v406 = vpop.xlane.xlu0 %405
          %v407 = vadd.f32 %v406, 1e-06
          %v408 = vmul.f32 %v400, %v407
          %v409 = vmul.f32 %v401, %v407
          %v410 = vrot.slane %v408, 4
          %v411 = vadd.f32 %v408, %v410
          %v412 = vrot.slane %v411, 2
          %v413 = vadd.f32 %v411, %v412
          %v414 = vrot.slane %v413, 1
          %v415 = vadd.f32 %v413, %v414
          %v416 = vrot.slane %v409, 4
          %v417 = vadd.f32 %v409, %v416
          %v418 = vrot.slane %v417, 2
          %v419 = vadd.f32 %v417, %v418
          %v420 = vrot.slane %v419, 1
          %v421 = vadd.f32 %v419, %v420
          %v422 = vadd.f32 %v415, 256.0
          %v423 = vadd.f32 %v421, 256.0
          %v424 = vrcp.pop %v422
          %v425 = vrcp.pop %v423
          %v426 = vmul.f32 %v422, %v424
          %v427 = vmul.f32 %v423, %v425
          %v428 = vsub.f32 2.0, %v426
          %v429 = vsub.f32 2.0, %v427
          %v430 = vmul.f32 %v424, %v428
          %v431 = vmul.f32 %v425, %v429
          %v432 = vadd.f32 %v354, %v356
          %433 = vadd.xlane.f32.xlu0 %v432
          %v434 = vpop.xlane.xlu0 %433
          %v435 = vadd.f32 %v360, %v362
          %436 = vadd.xlane.f32.xlu0 %v435
          %v437 = vpop.xlane.xlu0 %436
          %438 = vmatprep.subr.mxu0 %v403
          %439 = vmatpush1.xpose.msra.mxu0 %v402
          %440 = vmatprep.subr.mxu0 0.0
          %441 = vmatpush1.xpose.msra.mxu0 0.0
          %442 = vmatprep.subr.mxu0 0.0
          %443 = vmatpush1.xpose.msra.mxu0 0.0
          %444 = vmatprep.subr.mxu0 0.0
          %445 = vmatpush1.xpose.msra.mxu0 0.0
          %446 = vmatprep.subr.mxu0 0.0
          %447 = vmatpush1.xpose.msra.mxu0 0.0
          %448 = vmatprep.subr.mxu0 0.0
          %449 = vmatpush1.xpose.msra.mxu0 0.0
          %450 = vmatprep.subr.mxu0 0.0
          %451 = vmatpush1.xpose.msra.mxu0 0.0
          %452 = vmatprep.subr.mxu0 0.0
          %453 = vmatpush1.xpose.msra.mxu0 0.0
          %454 = vmatprep.subr.mxu0 0.0
          %455 = vmatpush1.xpose.msra.mxu0 0.0
          %456 = vmatprep.subr.mxu0 0.0
          %457 = vmatpush1.xpose.msra.mxu0 0.0
          %458 = vmatprep.subr.mxu0 0.0
          %459 = vmatpush1.xpose.msra.mxu0 0.0
          %460 = vmatprep.subr.mxu0 0.0
          %461 = vmatpush1.xpose.msra.mxu0 0.0
          %462 = vmatprep.subr.mxu0 0.0
          %463 = vmatpush1.xpose.msra.mxu0 0.0
          %464 = vmatprep.subr.mxu0 0.0
          %465 = vmatpush1.xpose.msra.mxu0 0.0
          %466 = vmatprep.subr.mxu0 0.0
          %467 = vmatpush1.xpose.msra.mxu0 0.0
          %468 = vmatprep.subr.mxu0 0.0
          %469 = vmatpush1.xpose.msra.mxu0 0.0
          %470 = vmatprep.subr.mxu0 0.0
          %471 = vmatpush1.xpose.msra.mxu0 0.0
          %472 = vmatprep.subr.mxu0 0.0
          %473 = vmatpush1.xpose.msra.mxu0 0.0
          %474 = vmatprep.subr.mxu0 0.0
          %475 = vmatpush1.xpose.msra.mxu0 0.0
          %476 = vmatprep.subr.mxu0 0.0
          %477 = vmatpush1.xpose.msra.mxu0 0.0
          %478 = vmatprep.subr.mxu0 0.0
          %479 = vmatpush1.xpose.msra.mxu0 0.0
          %480 = vmatprep.subr.mxu0 0.0
          %481 = vmatpush1.xpose.msra.mxu0 0.0
          %482 = vmatprep.subr.mxu0 0.0
          %483 = vmatpush1.xpose.msra.mxu0 0.0
          %484 = vmatprep.subr.mxu0 0.0
          %485 = vmatpush1.xpose.msra.mxu0 0.0
          %486 = vmatprep.subr.mxu0 0.0
          %487 = vmatpush1.xpose.msra.mxu0 0.0
          %488 = vmatprep.subr.mxu0 0.0
          %489 = vmatpush1.xpose.msra.mxu0 0.0
          %490 = vmatprep.subr.mxu0 0.0
          %491 = vmatpush1.xpose.msra.mxu0 0.0
          %492 = vmatprep.subr.mxu0 0.0
          %493 = vmatpush1.xpose.msra.mxu0 0.0
          %494 = vmatprep.subr.mxu0 0.0
          %495 = vmatpush1.xpose.msra.mxu0 0.0
          %496 = vmatprep.subr.mxu0 0.0
          %497 = vmatpush1.xpose.msra.mxu0 0.0
          %498 = vmatprep.subr.mxu0 0.0
          %499 = vmatpush1.xpose.msra.mxu0 0.0
          %500 = vmatprep.subr.mxu0 0.0
          %501 = vmatpush1.xpose.msra.mxu0 0.0
          %502 = vmatprep.mubr.f32.mxu0 %v356
          %503 = vmatmul.mubr.f32.gmra.mrb[0].mxu0 %v354
          %v504 = vpop.f32.mrb[0].mxu0
          %v505 = vadd.f32 0.0, %v504
          %v506 = vpop.f32.mrb[0].mxu0
          %507 = vmatprep.mubr.f32.mxu0 %v362
          %508 = vmatmul.mubr.f32.gmra.mrb[0].mxu0 %v360
          %v509 = vpop.f32.mrb[0].mxu0
          %v510 = vadd.f32 0.0, %v509
          %v511 = vpop.f32.mrb[0].mxu0
          %512 = vdwg.mxu0
          %vm513 = vcmask 64512
          %v515 = vsel %vm513, %v505, 0
          %v518 = vsel %vm513, %v510, 0
          %520 = vmatprep.subr.mxu0 %v401
          %521 = vmatpush1.msra.mxu0 %v400
          %522 = vmatprep.subr.mxu0 0.0
          %523 = vmatpush1.msra.mxu0 0.0
          %524 = vmatprep.subr.mxu0 0.0
          %525 = vmatpush1.msra.mxu0 0.0
          %526 = vmatprep.subr.mxu0 0.0
          %527 = vmatpush1.msra.mxu0 0.0
          %528 = vmatprep.subr.mxu0 0.0
          %529 = vmatpush1.msra.mxu0 0.0
          %530 = vmatprep.subr.mxu0 0.0
          %531 = vmatpush1.msra.mxu0 0.0
          %532 = vmatprep.subr.mxu0 0.0
          %533 = vmatpush1.msra.mxu0 0.0
          %534 = vmatprep.subr.mxu0 0.0
          %535 = vmatpush1.msra.mxu0 0.0
          %536 = vmatprep.subr.mxu0 0.0
          %537 = vmatpush1.msra.mxu0 0.0
          %538 = vmatprep.subr.mxu0 0.0
          %539 = vmatpush1.msra.mxu0 0.0
          %540 = vmatprep.subr.mxu0 0.0
          %541 = vmatpush1.msra.mxu0 0.0
          %542 = vmatprep.subr.mxu0 0.0
          %543 = vmatpush1.msra.mxu0 0.0
          %544 = vmatprep.subr.mxu0 0.0
          %545 = vmatpush1.msra.mxu0 0.0
          %546 = vmatprep.subr.mxu0 0.0
          %547 = vmatpush1.msra.mxu0 0.0
          %548 = vmatprep.subr.mxu0 0.0
          %549 = vmatpush1.msra.mxu0 0.0
          %550 = vmatprep.subr.mxu0 0.0
          %551 = vmatpush1.msra.mxu0 0.0
          %552 = vmatprep.subr.mxu0 0.0
          %553 = vmatpush1.msra.mxu0 0.0
          %554 = vmatprep.subr.mxu0 0.0
          %555 = vmatpush1.msra.mxu0 0.0
          %556 = vmatprep.subr.mxu0 0.0
          %557 = vmatpush1.msra.mxu0 0.0
          %558 = vmatprep.subr.mxu0 0.0
          %559 = vmatpush1.msra.mxu0 0.0
          %560 = vmatprep.subr.mxu0 0.0
          %561 = vmatpush1.msra.mxu0 0.0
          %562 = vmatprep.subr.mxu0 0.0
          %563 = vmatpush1.msra.mxu0 0.0
          %564 = vmatprep.subr.mxu0 0.0
          %565 = vmatpush1.msra.mxu0 0.0
          %566 = vmatprep.subr.mxu0 0.0
          %567 = vmatpush1.msra.mxu0 0.0
          %568 = vmatprep.subr.mxu0 0.0
          %569 = vmatpush1.msra.mxu0 0.0
          %570 = vmatprep.subr.mxu0 0.0
          %571 = vmatpush1.msra.mxu0 0.0
          %572 = vmatprep.subr.mxu0 0.0
          %573 = vmatpush1.msra.mxu0 0.0
          %574 = vmatprep.subr.mxu0 0.0
          %575 = vmatpush1.msra.mxu0 0.0
          %576 = vmatprep.subr.mxu0 0.0
          %577 = vmatpush1.msra.mxu0 0.0
          %578 = vmatprep.subr.mxu0 0.0
          %579 = vmatpush1.msra.mxu0 0.0
          %580 = vmatprep.subr.mxu0 0.0
          %581 = vmatpush1.msra.mxu0 0.0
          %582 = vmatprep.subr.mxu0 0.0
          %583 = vmatpush1.msra.mxu0 0.0
          %584 = vmatprep.mubr.f32.mxu0 0.0
          %585 = vmatmul.mubr.f32.gmra.mrb[0].mxu0 %v515
          %v586 = vpop.f32.mrb[0].mxu0
          %v587 = vadd.f32 0.0, %v586
          %v588 = vpop.f32.mrb[0].mxu0
          %v589 = vadd.f32 0.0, %v588
          %590 = vmatprep.mubr.f32.mxu0 0.0
          %591 = vmatmul.mubr.f32.gmra.mrb[0].mxu0 %v518
          %v592 = vpop.f32.mrb[0].mxu0
          %v593 = vadd.f32 0.0, %v592
          %v594 = vpop.f32.mrb[0].mxu0
          %v595 = vadd.f32 0.0, %v594
          %596 = vdwg.mxu0
          %v597 = vadd.f32 %v434, %v587
          %v598 = vadd.f32 %v434, %v589
          %v599 = vadd.f32 %v437, %v593
          %v600 = vadd.f32 %v437, %v595
          %v601 = vstv %s228
          %v602 = vmul.f32 %v601, %v430
          %v603 = vmul.f32 %v601, %v431
          %v604 = vmul.f32 %v597, %v602
          %v605 = vmul.f32 %v598, %v603
          %v606 = vmul.f32 %v599, %v602
          %v607 = vmul.f32 %v600, %v603
          %s608 = smul.addr %s235, 8
          %s609 = scalar_lea.vmem %s217, %s608 [#allocation6]
          %610 = vst [vmem:[%s609] sm:$0xff] %v604
          %611 = vst [vmem:[%s609 + $0x8] sm:$0xff] %v605
          %612 = vst [vmem:[%s609 + $0x10] sm:$0xff] %v606
          %613 = vst [vmem:[%s609 + $0x18] sm:$0xff] %v607
        $region45: #{tpu_custom_call.1} parent=35 // loop_footer
          %s234 = sadd.s32 1, %s230
        $region46: #{tpu_custom_call.1} parent=35 // loop_footer_branch
          %229 = sbr.rel target = $region42
        $region47: #{tpu_custom_call.1} parent=35 // loop_exit
          _
        %s614 = sand.u32 %s119, 1
        %s615 = scalar_lea.sflag [#allocation5], %s614
        %s616 = sand.u32 %s119, 1
        %s617 = smul.addr %s616, 64
        %s618 = scalar_lea.vmem [#allocation6], %s617
        // Predicated region
        $region48: #{tpu_custom_call.1} parent=35 // pred_check
          %p619 = pneg %p129
        $region49: #{tpu_custom_call.1} parent=35 // pred_check_branch
          %621 = sbr.rel (%p619) target = $region51
        $region50: #{tpu_custom_call.1} parent=35 // pred_region
          %s622 = smul.u32 2, %s22
          %s624 = ssub.s32 1024, 1024
          %625 = vsyncadd %s615, %s624
          %s626 = smul.addr %s622, 4
          %s627 = smul.addr %s626, 128
          %s628 = scalar_lea.hbm %s4, %s627
          %s629 = sshll.u32 %s618, 4
          %s630 = int_to_ptr.vmem [resolvable:$true] %s629
          %635 = dma.vmem_to_hbm [thread:$0]  %s630, 1024, %s628, %s615, 256, 256, 16
        $region51: #{tpu_custom_call.1} parent=35 // pred_fallthru
          _
      $region36: #{tpu_custom_call.1} parent=5 // pred_fallthru
        _
      %p636 = scmp.le.s32.totalorder 2, %s17
      // Predicated region
      $region52: #{tpu_custom_call.1} parent=5 // pred_check
        %p637 = pneg %p636
      $region53: #{tpu_custom_call.1} parent=5 // pred_check_branch
        %639 = sbr.rel (%p637) target = $region55
      $region54: #{tpu_custom_call.1} parent=5 // pred_region
        %s640 = ssub.s32 %s17, 2
        // Predicated region
        $region56: #{tpu_custom_call.1} parent=54 // pred_check
          %p641 = pneg %p135
        $region57: #{tpu_custom_call.1} parent=54 // pred_check_branch
          %643 = sbr.rel (%p641) target = $region59
        $region58: #{tpu_custom_call.1} parent=54 // pred_region
          %s644 = sand.u32 %s120, 1
          %s645 = scalar_lea.sflag [#allocation5], %s644
          %s646 = sand.u32 %s120, 1
          %s647 = smul.addr %s646, 64
          %s648 = scalar_lea.vmem [#allocation6], %s647
          %649 = dma.done %s645, 1024
        $region59: #{tpu_custom_call.1} parent=54 // pred_fallthru
          _
      $region55: #{tpu_custom_call.1} parent=5 // pred_fallthru
        _
    $region6: #{tpu_custom_call.1} parent=1 // loop_footer
      %s21 = sadd.s32 1, %s17
    $region7: #{tpu_custom_call.1} parent=1 // loop_footer_branch
      %16 = sbr.rel target = $region3
    $region8: #{tpu_custom_call.1} parent=1 // loop_exit
      _
    %650 = vsyncpa [#allocation4], 1
    %s651 = scalar_lea.sflag [#allocation4], 1
    %652 = vsyncpa %s651, 1
    %653 = vsyncpa [#allocation5], 1
    %s654 = scalar_lea.sflag [#allocation5], 1
    %655 = vsyncpa %s654, 1

</llo_original>
